<compile_context>
chip_gen: v6e
topology: v6e:2x2x1
jax: 0.10.0
libtpu: 0.0.40
codegen_flags: <defaults>
</compile_context>

<pallas_src>
import jax
import jax.numpy as jnp
import numpy as np
from jax.experimental import pallas as pl
from jax.experimental.pallas import tpu as pltpu


def _round_up(x, m):
    return ((x + m - 1) // m) * m


def _pick_tm(M):
    """Row tile. Full batch when small (no padding, no output slice)."""
    if M <= 512:
        return M
    for cand in (512, 256, 128):
        if M % cand == 0:
            return cand
    # No exact fit: least padded rows; ties broken toward the larger tile.
    return min((512, 256, 128), key=lambda c: (_round_up(M, c) - M, -c))


def _pick_tn(Np, k_total):
    """Lane tile: lane-dense, big enough to amortize per-step overhead, but
    leaving >= 2 N tiles (v7x megacore) and fitting double-buffered weight
    panels in VMEM on every generation."""
    if Np % 128 != 0:            # only when hidden < 128 (prepare pads otherwise)
        return Np
    budget = 24 * 1024 * 1024    # double-buffered f32 weight panels
    cands = [c for c in (1024, 512, 384, 256, 128)
             if Np % c == 0 and 2 * k_total * c * 4 <= budget]
    if not cands:
        # TODO(synk): tile K (3-D grid + accumulator) for very large input+hidden.
        return 128
    for c in cands:
        if Np // c >= 2:
            return c
    return cands[0]              # Np itself fits a single lane-dense tile


def _make_gate_kernel(has_h, has_b):
    """out = x @ W_ih (+ h @ W_hh) (+ b); single K shot, f32 accumulate on MXU."""
    def kernel(*refs):
        refs = list(refs)
        x_ref = refs.pop(0)
        h_ref = refs.pop(0) if has_h else None
        wih_ref = refs.pop(0)
        whh_ref = refs.pop(0) if has_h else None
        b_ref = refs.pop(0) if has_b else None
        out_ref = refs.pop(0)

        acc = jnp.dot(x_ref[...], wih_ref[...], preferred_element_type=jnp.float32)
        if has_h:
            acc = acc + jnp.dot(h_ref[...], whh_ref[...],
                                preferred_element_type=jnp.float32)
        if has_b:
            acc = acc + b_ref[...]
        out_ref[...] = acc.astype(out_ref.dtype)

    return kernel


def prepare_rnn_cell_params(weight_ih, weight_hh, bias_ih=None, bias_hh=None):
    """One-time (per parameter set / outside the timestep loop) preparation:
    pads the hidden (N) dim to a lane-dense multiple of 128 when needed and
    fuses the two bias vectors into a single (1, Np) row."""
    if (bias_ih is None) != (bias_hh is None):
        raise ValueError("Provide both bias_ih and bias_hh, or neither.")
    input_size, hidden_size = weight_ih.shape
    assert weight_hh.shape == (hidden_size, hidden_size)

    Np = hidden_size
    if Np > 128 and Np % 128 != 0:
        Np = _round_up(hidden_size, 128)
    if Np != hidden_size:
        weight_ih = jnp.pad(weight_ih, ((0, 0), (0, Np - hidden_size)))
        weight_hh = jnp.pad(weight_hh, ((0, 0), (0, Np - hidden_size)))

    if bias_ih is not None:
        b = (bias_ih + bias_hh)
        if Np != hidden_size:
            b = jnp.pad(b, (0, Np - hidden_size))
        b = b.reshape(1, Np)
    else:
        b = None

    # TODO(synk): for a T-step RNN, fuse the time loop into one pallas_call and
    # keep these (bf16-cast, optionally) weights VMEM-resident across steps.
    return {"w_ih": weight_ih, "w_hh": weight_hh, "b": b,
            "input_size": input_size, "hidden_size": hidden_size,
            "padded_hidden": Np}


def rnn_cell_pallas(x, hstate, params):
    """Pallas equivalent of RNNCell.forward (returns the pre-activation gate)."""
    assert x.ndim in (1, 2), "RNNCell: expected 1-D or 2-D input"
    is_batched = x.ndim == 2
    if not is_batched:
        x = x[None, :]
        if hstate is not None and hstate.ndim == 1:
            hstate = hstate[None, :]

    w_ih, w_hh, b = params["w_ih"], params["w_hh"], params["b"]
    N, Np = params["hidden_size"], params["padded_hidden"]
    M, Kx = x.shape
    assert Kx == params["input_size"]
    has_h = hstate is not None
    has_b = b is not None
    Kh = N if has_h else 0
    if has_h:
        assert hstate.shape == (M, N)

    tm = _pick_tm(M)
    Mp = _round_up(M, tm)
    tn = _pick_tn(Np, Kx + Kh)

    if Mp != M:  # cheap: pads activations only, never the weights
        x = jnp.pad(x, ((0, Mp - M), (0, 0)))
        if has_h:
            hstate = jnp.pad(hstate, ((0, Mp - M), (0, 0)))

    in_specs = [pl.BlockSpec((tm, Kx), lambda i, j: (i, 0))]
    operands = [x]
    if has_h:
        in_specs.append(pl.BlockSpec((tm, Kh), lambda i, j: (i, 0)))
        operands.append(hstate)
    in_specs.append(pl.BlockSpec((Kx, tn), lambda i, j: (0, j)))
    operands.append(w_ih)
    if has_h:
        in_specs.append(pl.BlockSpec((Kh, tn), lambda i, j: (0, j)))
        operands.append(w_hh)
    if has_b:
        in_specs.append(pl.BlockSpec((1, tn), lambda i, j: (0, j)))
        operands.append(b)

    gate = pl.pallas_call(
        _make_gate_kernel(has_h, has_b),
        out_shape=jax.ShapeDtypeStruct((Mp, Np), x.dtype),
        grid=(Mp // tm, Np // tn),
        in_specs=in_specs,
        out_specs=pl.BlockSpec((tm, tn), lambda i, j: (i, j)),
        compiler_params=pltpu.CompilerParams(
            dimension_semantics=("parallel", "parallel"),
            vmem_limit_bytes=48 * 1024 * 1024,
        ),
    )(*operands)

    if Mp != M or Np != N:
        # Only taken when padding was needed; for a recurrent loop, keep the
        # padded gate instead and slice once at the end.
        gate = gate[:M, :N]
    if not is_batched:
        gate = gate[0]
    return gate


def init_rnn_cell_params(key, input_size, hidden_size, bias=True):
    """Matches the PyTorch module: W ~ N(0, sqrt(2/input_size)), biases zero."""
    k_ih, k_hh = jax.random.split(key)
    std = np.sqrt(2.0 / input_size).astype(np.float32)
    weight_ih = std * jax.random.normal(k_ih, (input_size, hidden_size), dtype=jnp.float32)
    weight_hh = std * jax.random.normal(k_hh, (hidden_size, hidden_size), dtype=jnp.float32)
    if bias:
        bias_ih = jnp.zeros((hidden_size,), dtype=jnp.float32)
        bias_hh = jnp.zeros((hidden_size,), dtype=jnp.float32)
    else:
        bias_ih = bias_hh = None
    return weight_ih, weight_hh, bias_ih, bias_hh


if __name__ == "__main__":
    key = jax.random.PRNGKey(0)
    k_params, k_x, k_h = jax.random.split(key, 3)

    batch = 2
    input_size = 16
    hidden_size = 32

    weight_ih, weight_hh, bias_ih, bias_hh = init_rnn_cell_params(
        k_params, input_size, hidden_size, bias=True)
    params = prepare_rnn_cell_params(weight_ih, weight_hh, bias_ih, bias_hh)
    params_nobias = prepare_rnn_cell_params(weight_ih, weight_hh, None, None)

    x = jax.random.normal(k_x, (batch, input_size), dtype=jnp.float32)
    h = jax.random.normal(k_h, (batch, hidden_size), dtype=jnp.float32)

    # 1) Batched, with explicit hstate and biases.
    gate = jax.block_until_ready(rnn_cell_pallas(x, h, params))
    ref = x @ weight_ih + h @ weight_hh + bias_ih + bias_hh
    np.testing.assert_allclose(np.asarray(gate), np.asarray(ref), rtol=1e-5, atol=1e-5)

    # 2) hstate=None path (zeros hidden state -> h half skipped entirely).
    gate0 = jax.block_until_ready(rnn_cell_pallas(x, None, params))
    ref0 = x @ weight_ih + bias_ih + bias_hh
    np.testing.assert_allclose(np.asarray(gate0), np.asarray(ref0), rtol=1e-5, atol=1e-5)

    # 3) Unbatched (1-D) input path.
    gate1 = jax.block_until_ready(rnn_cell_pallas(x[0], h[0], params))
    np.testing.assert_allclose(np.asarray(gate1), np.asarray(ref[0]), rtol=1e-5, atol=1e-5)

    # 4) bias=False path (bias operand specialized away inside the kernel).
    gate_nb = jax.block_until_ready(rnn_cell_pallas(x, h, params_nobias))
    ref_nb = x @ weight_ih + h @ weight_hh
    np.testing.assert_allclose(np.asarray(gate_nb), np.asarray(ref_nb), rtol=1e-5, atol=1e-5)

    print("KERNEL_OK")
</pallas_src>

<mosaic_0001>
module attributes {stable_mosaic.version = 11 : i64} {
  func.func @kernel(%arg0: i32, %arg1: i32, %arg2: memref<2x16xf32, #tpu.memory_space<vmem>>, %arg3: memref<2x32xf32, #tpu.memory_space<vmem>>, %arg4: memref<16x32xf32, #tpu.memory_space<vmem>>, %arg5: memref<32x32xf32, #tpu.memory_space<vmem>>, %arg6: memref<1x32xf32, #tpu.memory_space<vmem>>, %arg7: memref<2x32xf32, #tpu.memory_space<vmem>>) attributes {dimension_semantics = [#tpu.dimension_semantics<parallel>, #tpu.dimension_semantics<parallel>], iteration_bounds = array<i64: 1, 1>, scalar_prefetch = 0 : i64, scratch_operands = 0 : i64, tpu.core_type = #tpu.core_type<tc>, window_params = [{transform_indices = @transform_0, window_bounds = array<i64: 2, 16>}, {transform_indices = @transform_1, window_bounds = array<i64: 2, 32>}, {transform_indices = @transform_2, window_bounds = array<i64: 16, 32>}, {transform_indices = @transform_3, window_bounds = array<i64: 32, 32>}, {transform_indices = @transform_4, window_bounds = array<i64: 1, 32>}, {transform_indices = @transform_5, window_bounds = array<i64: 2, 32>}]} {
    %c0 = arith.constant 0 : index
    %c0_0 = arith.constant 0 : index
    %0 = vector.load %arg2[%c0, %c0_0] : memref<2x16xf32, #tpu.memory_space<vmem>>, vector<2x16xf32>
    %c0_1 = arith.constant 0 : index
    %c0_2 = arith.constant 0 : index
    %1 = vector.load %arg4[%c0_1, %c0_2] : memref<16x32xf32, #tpu.memory_space<vmem>>, vector<16x32xf32>
    %cst = arith.constant dense<0.000000e+00> : vector<2x32xf32>
    %2 = tpu.matmul %0, %1, %cst {dimension_numbers = #tpu.dot_dimension_numbers<[1], [0], [0], [1], [0, 0, 1, 1], [], []>} : vector<2x16xf32>, vector<16x32xf32>, vector<2x32xf32> -> vector<2x32xf32>
    %c0_3 = arith.constant 0 : index
    %c0_4 = arith.constant 0 : index
    %3 = vector.load %arg3[%c0_3, %c0_4] : memref<2x32xf32, #tpu.memory_space<vmem>>, vector<2x32xf32>
    %c0_5 = arith.constant 0 : index
    %c0_6 = arith.constant 0 : index
    %4 = vector.load %arg5[%c0_5, %c0_6] : memref<32x32xf32, #tpu.memory_space<vmem>>, vector<32x32xf32>
    %cst_7 = arith.constant dense<0.000000e+00> : vector<2x32xf32>
    %5 = tpu.matmul %3, %4, %cst_7 {dimension_numbers = #tpu.dot_dimension_numbers<[1], [0], [0], [1], [0, 0, 1, 1], [], []>} : vector<2x32xf32>, vector<32x32xf32>, vector<2x32xf32> -> vector<2x32xf32>
    %6 = arith.addf %2, %5 : vector<2x32xf32>
    %c0_8 = arith.constant 0 : index
    %c0_9 = arith.constant 0 : index
    %7 = vector.load %arg6[%c0_8, %c0_9] : memref<1x32xf32, #tpu.memory_space<vmem>>, vector<1x32xf32>
    %8 = vector.broadcast %7 : vector<1x32xf32> to vector<2x32xf32>
    %9 = arith.addf %6, %8 : vector<2x32xf32>
    %c0_10 = arith.constant 0 : index
    %c0_11 = arith.constant 0 : index
    %10 = vector.load %arg7[%c0_10, %c0_11] : memref<2x32xf32, #tpu.memory_space<vmem>>, vector<2x32xf32>
    tpu.vector_store %arg7[%c0_10, %c0_11], %9 {strides = array<i32>} : memref<2x32xf32, #tpu.memory_space<vmem>>, vector<2x32xf32>,
    return
  }
  func.func @transform_0(%arg0: i32, %arg1: i32) -> (i32, i32) {
    %c0_i32 = arith.constant 0 : i32
    %c0_i32_0 = arith.constant 0 : i32
    return %arg0, %c0_i32 : i32, i32
  }
  func.func @transform_1(%arg0: i32, %arg1: i32) -> (i32, i32) {
    %c0_i32 = arith.constant 0 : i32
    %c0_i32_0 = arith.constant 0 : i32
    return %arg0, %c0_i32 : i32, i32
  }
  func.func @transform_2(%arg0: i32, %arg1: i32) -> (i32, i32) {
    %c0_i32 = arith.constant 0 : i32
    %c0_i32_0 = arith.constant 0 : i32
    return %c0_i32, %arg1 : i32, i32
  }
  func.func @transform_3(%arg0: i32, %arg1: i32) -> (i32, i32) {
    %c0_i32 = arith.constant 0 : i32
    %c0_i32_0 = arith.constant 0 : i32
    return %c0_i32, %arg1 : i32, i32
  }
  func.func @transform_4(%arg0: i32, %arg1: i32) -> (i32, i32) {
    %c0_i32 = arith.constant 0 : i32
    %c0_i32_0 = arith.constant 0 : i32
    return %c0_i32, %arg1 : i32, i32
  }
  func.func @transform_5(%arg0: i32, %arg1: i32) -> (i32, i32) {
    %c0_i32 = arith.constant 0 : i32
    return %arg0, %arg1 : i32, i32
  }
}

</mosaic_0001>

<llo_original>
// kernel: tpu_custom_call.1
$region0: #{tpu_custom_call.1}
  #allocation0 [shape = 'u32[]', space=smem, size = 0x4, offset = 0x4, fixed_abs, tag = 'smem constant byte address 0x4 - core index']
  #allocation1 [shape = 'u32[144,128]{1,0:T(1,128)}', space=vmem, size = 0x12000, scoped, tag = 'internal scratch']
  %s0 = inlined_call_operand.hbm [shape: f32[2,16], index: 0, kind: input, shape index: {}]
  %s1 = inlined_call_operand.hbm [shape: f32[2,32], index: 1, kind: input, shape index: {}]
  %s2 = inlined_call_operand.hbm [shape: f32[16,32], index: 2, kind: input, shape index: {}]
  %s3 = inlined_call_operand.hbm [shape: f32[32,32], index: 3, kind: input, shape index: {}]
  %s4 = inlined_call_operand.vmem [shape: f32[1,32], index: 4, kind: input, shape index: {}]
  %s5 = inlined_call_operand.hbm [shape: f32[2,32], index: 5, kind: output, shape index: {}]
  %s6 = sld [smem:[#allocation0]]
  $region46: #{tpu_custom_call.1} parent=0
    _
  %s8 = ssub.s32 1, %s6
  %s9 = scalar_select 0, %s8, %s6
  $region1: #{tpu_custom_call.1} parent=0
    #allocation2 [shape = 'u8[1024]{0}', space=vmem, size = 0x400, scoped, tag = 'input window, operand 0, single buffered']
    #allocation3 [shape = 's32[1]{0}', space=sflag, size = 0x4, scoped, tag = 'scoped memory for tpu_custom_call.1']
    #allocation4 [shape = 's32[1]{0}', space=sflag, size = 0x4, scoped, tag = 'scoped memory for tpu_custom_call.1']
    #allocation5 [shape = 'u8[1024]{0}', space=vmem, size = 0x400, scoped, tag = 'input window, operand 1, single buffered']
    #allocation6 [shape = 's32[1]{0}', space=sflag, size = 0x4, scoped, tag = 'scoped memory for tpu_custom_call.1']
    #allocation7 [shape = 'u8[8192]{0}', space=vmem, size = 0x2000, scoped, tag = 'input window, operand 2, single buffered']
    #allocation8 [shape = 'u8[16384]{0}', space=vmem, size = 0x4000, scoped, tag = 'input window, operand 3, single buffered']
    #allocation9 [shape = 's32[1]{0}', space=sflag, size = 0x4, scoped, tag = 'scoped memory for tpu_custom_call.1']
    #allocation10 [shape = 'u8[1024]{0}', space=vmem, size = 0x400, scoped, tag = 'output window, operand 0, single buffered']
    %10 = vsyncpa [#allocation3], 0
    %11 = vsyncpa [#allocation6], 0
    %12 = vsyncpa [#allocation9], 0
    %13 = vsyncpa [#allocation4], 0
    // Predicated region
    $region2: #{tpu_custom_call.1} parent=1 // pred_check
      _
    $region3: #{tpu_custom_call.1} parent=1 // pred_check_branch
      %15 = sbr.rel (0) target = $region5
    $region4: #{tpu_custom_call.1} parent=1 // pred_region
      %s17 = ssub.s32 32, 32
      %18 = vsyncadd [#allocation3], %s17
      %s20 = sshll.u32 [#allocation2], 4
      %s21 = int_to_ptr.vmem [resolvable:$true] %s20
      %23 = dma.hbm_to_vmem [thread:$0]  %s0, 32, %s21, [#allocation3]
    $region5: #{tpu_custom_call.1} parent=1 // pred_fallthru
      _
    // Predicated region
    $region6: #{tpu_custom_call.1} parent=1 // pred_check
      _
    $region7: #{tpu_custom_call.1} parent=1 // pred_check_branch
      %25 = sbr.rel (0) target = $region9
    $region8: #{tpu_custom_call.1} parent=1 // pred_region
      %s27 = ssub.s32 32, 32
      %28 = vsyncadd [#allocation6], %s27
      %s30 = sshll.u32 [#allocation5], 4
      %s31 = int_to_ptr.vmem [resolvable:$true] %s30
      %33 = dma.hbm_to_vmem [thread:$0]  %s1, 32, %s31, [#allocation6]
    $region9: #{tpu_custom_call.1} parent=1 // pred_fallthru
      _
    // Predicated region
    $region10: #{tpu_custom_call.1} parent=1 // pred_check
      _
    $region11: #{tpu_custom_call.1} parent=1 // pred_check_branch
      %35 = sbr.rel (0) target = $region13
    $region12: #{tpu_custom_call.1} parent=1 // pred_region
      %s37 = ssub.s32 256, 256
      %38 = vsyncadd [#allocation6], %s37
      %s39 = sshll.u32 [#allocation7], 4
      %s40 = int_to_ptr.vmem [resolvable:$true] %s39
      %45 = dma.hbm_to_vmem [thread:$0]  %s2, 256, %s40, [#allocation6], 128, 128, 8
    $region13: #{tpu_custom_call.1} parent=1 // pred_fallthru
      _
    // Predicated region
    $region14: #{tpu_custom_call.1} parent=1 // pred_check
      _
    $region15: #{tpu_custom_call.1} parent=1 // pred_check_branch
      %47 = sbr.rel (0) target = $region17
    $region16: #{tpu_custom_call.1} parent=1 // pred_region
      %s49 = ssub.s32 512, 512
      %50 = vsyncadd [#allocation9], %s49
      %s51 = sshll.u32 [#allocation8], 4
      %s52 = int_to_ptr.vmem [resolvable:$true] %s51
      %57 = dma.hbm_to_vmem [thread:$0]  %s3, 512, %s52, [#allocation9], 128, 128, 8
    $region17: #{tpu_custom_call.1} parent=1 // pred_fallthru
      _
    // Predicated region
    $region18: #{tpu_custom_call.1} parent=1 // pred_check
      _
    $region19: #{tpu_custom_call.1} parent=1 // pred_check_branch
      %59 = sbr.rel (0) target = $region21
    $region20: #{tpu_custom_call.1} parent=1 // pred_region
      _
    $region21: #{tpu_custom_call.1} parent=1 // pred_fallthru
      _
    // Predicated region
    $region22: #{tpu_custom_call.1} parent=1 // pred_check
      _
    $region23: #{tpu_custom_call.1} parent=1 // pred_check_branch
      %61 = sbr.rel (0) target = $region25
    $region24: #{tpu_custom_call.1} parent=1 // pred_region
      %62 = dma.done [#allocation3], 32
    $region25: #{tpu_custom_call.1} parent=1 // pred_fallthru
      _
    // Predicated region
    $region26: #{tpu_custom_call.1} parent=1 // pred_check
      _
    $region27: #{tpu_custom_call.1} parent=1 // pred_check_branch
      %64 = sbr.rel (0) target = $region29
    $region28: #{tpu_custom_call.1} parent=1 // pred_region
      %65 = dma.done [#allocation6], 32
    $region29: #{tpu_custom_call.1} parent=1 // pred_fallthru
      _
    // Predicated region
    $region30: #{tpu_custom_call.1} parent=1 // pred_check
      _
    $region31: #{tpu_custom_call.1} parent=1 // pred_check_branch
      %67 = sbr.rel (0) target = $region33
    $region32: #{tpu_custom_call.1} parent=1 // pred_region
      %68 = dma.done [#allocation6], 256
    $region33: #{tpu_custom_call.1} parent=1 // pred_fallthru
      _
    // Predicated region
    $region34: #{tpu_custom_call.1} parent=1 // pred_check
      _
    $region35: #{tpu_custom_call.1} parent=1 // pred_check_branch
      %70 = sbr.rel (0) target = $region37
    $region36: #{tpu_custom_call.1} parent=1 // pred_region
      %71 = dma.done [#allocation9], 512
    $region37: #{tpu_custom_call.1} parent=1 // pred_fallthru
      _
    %v72 = vld [vmem:[#allocation2] sm:$0x3]
    %v73 = vld [vmem:[#allocation7] sm:$0xff]
    %v74 = vld [vmem:[#allocation7 + $0x8] sm:$0xff]
    %v75 = vld [vmem:[#allocation5] sm:$0x3]
    %v76 = vld [vmem:[#allocation8] sm:$0xff]
    %v77 = vld [vmem:[#allocation8 + $0x8] sm:$0xff]
    %v78 = vld [vmem:[#allocation8 + $0x10] sm:$0xff]
    %v79 = vld [vmem:[#allocation8 + $0x18] sm:$0xff]
    %vm80 = vcmask 261120
    %v82 = vsel %vm80, %v75, 0
    %84 = vmatprep.subr.mxu0 0.0
    %85 = vmatpush1.msra.mxu0 0.0
    %86 = vmatprep.subr.mxu0 0.0
    %87 = vmatpush1.msra.mxu0 0.0
    %88 = vmatprep.subr.mxu0 0.0
    %89 = vmatpush1.msra.mxu0 0.0
    %90 = vmatprep.subr.mxu0 0.0
    %91 = vmatpush1.msra.mxu0 0.0
    %92 = vmatprep.subr.mxu0 0.0
    %93 = vmatpush1.msra.mxu0 0.0
    %94 = vmatprep.subr.mxu0 0.0
    %95 = vmatpush1.msra.mxu0 0.0
    %96 = vmatprep.subr.mxu0 0.0
    %97 = vmatpush1.msra.mxu0 0.0
    %98 = vmatprep.subr.mxu0 0.0
    %99 = vmatpush1.msra.mxu0 0.0
    %100 = vmatprep.subr.mxu0 0.0
    %101 = vmatpush1.msra.mxu0 0.0
    %102 = vmatprep.subr.mxu0 0.0
    %103 = vmatpush1.msra.mxu0 0.0
    %104 = vmatprep.subr.mxu0 0.0
    %105 = vmatpush1.msra.mxu0 0.0
    %106 = vmatprep.subr.mxu0 0.0
    %107 = vmatpush1.msra.mxu0 0.0
    %108 = vmatprep.subr.mxu0 0.0
    %109 = vmatpush1.msra.mxu0 %v79
    %110 = vmatprep.subr.mxu0 0.0
    %111 = vmatpush1.msra.mxu0 %v78
    %112 = vmatprep.subr.mxu0 0.0
    %113 = vmatpush1.msra.mxu0 %v77
    %114 = vmatprep.subr.mxu0 0.0
    %115 = vmatpush1.msra.mxu0 %v76
    %116 = vmatprep.subr.mxu0 0.0
    %117 = vmatpush2.msra.mxu0 0.0
    %118 = vmatprep.subr.mxu0 0.0
    %119 = vmatpush2.msra.mxu0 0.0
    %120 = vmatprep.subr.mxu0 0.0
    %121 = vmatpush2.msra.mxu0 0.0
    %122 = vmatprep.subr.mxu0 0.0
    %123 = vmatpush2.msra.mxu0 0.0
    %124 = vmatprep.subr.mxu0 0.0
    %125 = vmatpush2.msra.mxu0 0.0
    %126 = vmatprep.subr.mxu0 0.0
    %127 = vmatpush2.msra.mxu0 0.0
    %128 = vmatprep.subr.mxu0 0.0
    %129 = vmatpush2.msra.mxu0 0.0
    %130 = vmatprep.subr.mxu0 0.0
    %131 = vmatpush2.msra.mxu0 0.0
    %132 = vmatprep.subr.mxu0 0.0
    %133 = vmatpush2.msra.mxu0 0.0
    %134 = vmatprep.subr.mxu0 0.0
    %135 = vmatpush2.msra.mxu0 0.0
    %136 = vmatprep.subr.mxu0 0.0
    %137 = vmatpush2.msra.mxu0 0.0
    %138 = vmatprep.subr.mxu0 0.0
    %139 = vmatpush2.msra.mxu0 0.0
    %140 = vmatprep.subr.mxu0 0.0
    %141 = vmatpush2.msra.mxu0 0.0
    %142 = vmatprep.subr.mxu0 0.0
    %143 = vmatpush2.msra.mxu0 0.0
    %144 = vmatprep.subr.mxu0 0.0
    %145 = vmatpush2.msra.mxu0 0.0
    %146 = vmatprep.subr.mxu0 0.0
    %147 = vmatpush2.msra.mxu0 0.0
    %148 = vmatprep.mubr.f32.mxu0 0.0
    %149 = vmatmul.mubr.f32.gmra.mxu0 %v82
    %v150 = vpop.f32.mrf.mxu0
    %v151 = vadd.f32 0.0, %v150
    %v152 = vpop.f32.mrf.mxu0
    %153 = vdwg.mxu0
    %vm154 = vcmask 130048
    %v156 = vsel %vm154, %v72, 0
    %158 = vmatprep.subr.mxu0 0.0
    %159 = vmatpush1.msra.mxu0 0.0
    %160 = vmatprep.subr.mxu0 0.0
    %161 = vmatpush1.msra.mxu0 0.0
    %162 = vmatprep.subr.mxu0 0.0
    %163 = vmatpush1.msra.mxu0 0.0
    %164 = vmatprep.subr.mxu0 0.0
    %165 = vmatpush1.msra.mxu0 0.0
    %166 = vmatprep.subr.mxu0 0.0
    %167 = vmatpush1.msra.mxu0 0.0
    %168 = vmatprep.subr.mxu0 0.0
    %169 = vmatpush1.msra.mxu0 0.0
    %170 = vmatprep.subr.mxu0 0.0
    %171 = vmatpush1.msra.mxu0 0.0
    %172 = vmatprep.subr.mxu0 0.0
    %173 = vmatpush1.msra.mxu0 0.0
    %174 = vmatprep.subr.mxu0 0.0
    %175 = vmatpush1.msra.mxu0 0.0
    %176 = vmatprep.subr.mxu0 0.0
    %177 = vmatpush1.msra.mxu0 0.0
    %178 = vmatprep.subr.mxu0 0.0
    %179 = vmatpush1.msra.mxu0 0.0
    %180 = vmatprep.subr.mxu0 0.0
    %181 = vmatpush1.msra.mxu0 0.0
    %182 = vmatprep.subr.mxu0 0.0
    %183 = vmatpush1.msra.mxu0 0.0
    %184 = vmatprep.subr.mxu0 0.0
    %185 = vmatpush1.msra.mxu0 0.0
    %186 = vmatprep.subr.mxu0 0.0
    %187 = vmatpush1.msra.mxu0 %v74
    %188 = vmatprep.subr.mxu0 0.0
    %189 = vmatpush1.msra.mxu0 %v73
    %190 = vmatprep.subr.mxu0 0.0
    %191 = vmatpush2.msra.mxu0 0.0
    %192 = vmatprep.subr.mxu0 0.0
    %193 = vmatpush2.msra.mxu0 0.0
    %194 = vmatprep.subr.mxu0 0.0
    %195 = vmatpush2.msra.mxu0 0.0
    %196 = vmatprep.subr.mxu0 0.0
    %197 = vmatpush2.msra.mxu0 0.0
    %198 = vmatprep.subr.mxu0 0.0
    %199 = vmatpush2.msra.mxu0 0.0
    %200 = vmatprep.subr.mxu0 0.0
    %201 = vmatpush2.msra.mxu0 0.0
    %202 = vmatprep.subr.mxu0 0.0
    %203 = vmatpush2.msra.mxu0 0.0
    %204 = vmatprep.subr.mxu0 0.0
    %205 = vmatpush2.msra.mxu0 0.0
    %206 = vmatprep.subr.mxu0 0.0
    %207 = vmatpush2.msra.mxu0 0.0
    %208 = vmatprep.subr.mxu0 0.0
    %209 = vmatpush2.msra.mxu0 0.0
    %210 = vmatprep.subr.mxu0 0.0
    %211 = vmatpush2.msra.mxu0 0.0
    %212 = vmatprep.subr.mxu0 0.0
    %213 = vmatpush2.msra.mxu0 0.0
    %214 = vmatprep.subr.mxu0 0.0
    %215 = vmatpush2.msra.mxu0 0.0
    %216 = vmatprep.subr.mxu0 0.0
    %217 = vmatpush2.msra.mxu0 0.0
    %218 = vmatprep.subr.mxu0 0.0
    %219 = vmatpush2.msra.mxu0 0.0
    %220 = vmatprep.subr.mxu0 0.0
    %221 = vmatpush2.msra.mxu0 0.0
    %222 = vmatprep.mubr.f32.mxu0 0.0
    %223 = vmatmul.mubr.f32.gmra.mxu0 %v156
    %v224 = vpop.f32.mrf.mxu0
    %v225 = vadd.f32 %v151, %v224
    %v226 = vpop.f32.mrf.mxu0
    %227 = vdwg.mxu0
    %v228 = vld [vmem:[%s4] sm:$0x1]
    %v230 = vlaneseq
    %v231 = vshrl.u32 %v230, 7
    %v232 = vsub.s32 0, %v231
    %v233 = vrot.slane %v228, %v232
    %v235 = vadd.f32 %v225, %v233
    %vm236 = vcmask 254976
    %237 = vst.msk [vmem:[#allocation10] sm:$0x3] %vm236, %v235
    // Predicated region
    $region38: #{tpu_custom_call.1} parent=1 // pred_check
      _
    $region39: #{tpu_custom_call.1} parent=1 // pred_check_branch
      %239 = sbr.rel (0) target = $region41
    $region40: #{tpu_custom_call.1} parent=1 // pred_region
      %s241 = ssub.s32 32, 32
      %242 = vsyncadd [#allocation4], %s241
      %s244 = sshll.u32 [#allocation10], 4
      %s245 = int_to_ptr.vmem [resolvable:$true] %s244
      %247 = dma.vmem_to_hbm [thread:$0]  %s245, 32, %s5, [#allocation4]
    $region41: #{tpu_custom_call.1} parent=1 // pred_fallthru
      _
    // Predicated region
    $region42: #{tpu_custom_call.1} parent=1 // pred_check
      _
    $region43: #{tpu_custom_call.1} parent=1 // pred_check_branch
      %249 = sbr.rel (0) target = $region45
    $region44: #{tpu_custom_call.1} parent=1 // pred_region
      %250 = dma.done [#allocation4], 32
    $region45: #{tpu_custom_call.1} parent=1 // pred_fallthru
      _
    %251 = vsyncpa [#allocation3], 1
    %252 = vsyncpa [#allocation6], 1
    %253 = vsyncpa [#allocation9], 1
    %254 = vsyncpa [#allocation4], 1

</llo_original>
